<compile_context>
chip_gen: v5e
topology: v5e:2x2
jax: 0.10.0
libtpu: 0.0.40
codegen_flags: <defaults>
</compile_context>

<pallas_src>
import functools

import jax
import jax.numpy as jnp
from jax.experimental import pallas as pl
from jax.experimental.pallas import tpu as pltpu

_LANE = 128
_SUBLANE = 8
_TK_MAX = 2048                       # max HW-chunk width (lanes)
_TARGET_IN_BYTES = 8 * 1024 * 1024   # fused per-step input budget (pre double-buffer)


def _choose_tk(hw):
    """HW chunk width: a multiple of 128 that divides hw when possible."""
    if hw % _LANE == 0:
        tk = min(hw, _TK_MAX)
        tk -= tk % _LANE
        while hw % tk:
            tk -= _LANE
        return tk
    # hw not lane-aligned (e.g. 7*7=49): take the whole row in one chunk
    # (full-extent last dim is always a legal block dim).
    return hw


def _choose_tm(n_rows, tk, itemsize, n_views):
    """Rows per step: multiple of 8 (16 for bf16), sized from the VMEM budget."""
    sub = _SUBLANE * max(1, 4 // itemsize)
    tk_padded = ((tk + _LANE - 1) // _LANE) * _LANE      # lane padding in VMEM
    per_row_bytes = max(1, n_views * tk_padded * itemsize)
    tm = max(sub, _TARGET_IN_BYTES // per_row_bytes)
    tm -= tm % sub
    rows_pad = ((n_rows + sub - 1) // sub) * sub
    return max(sub, min(tm, rows_pad))


def _row_sum(x, tk):
    """VPU-first reduction of a (TM, TK) f32 tile -> (TM, 1)."""
    nfull = tk // _LANE
    if nfull >= 2:
        # Fold lane-tile-aligned 128-wide slices with VPU adds (no copies,
        # slices are tile-aligned) ...
        s = x[:, :_LANE]
        for j in range(1, nfull):
            s = s + x[:, j * _LANE:(j + 1) * _LANE]
        # ... then one 128-wide cross-lane reduce on the XLU.
        partial = jnp.sum(s, axis=-1, keepdims=True)
        if tk % _LANE:
            partial = partial + jnp.sum(x[:, nfull * _LANE:], axis=-1, keepdims=True)
        return partial
    return jnp.sum(x, axis=-1, keepdims=True)


def _avg_pool_kernel_single(*refs, n_views, tk, inv_hw):
    """Whole HW extent in one chunk: no accumulator scratch needed."""
    x_refs = refs[:n_views]
    o_refs = refs[n_views:]
    for x_ref, o_ref in zip(x_refs, o_refs):
        x = x_ref[...].astype(jnp.float32)                      # (TM, TK)
        o_ref[...] = (_row_sum(x, tk) * inv_hw).astype(o_ref.dtype)


def _avg_pool_kernel_multi(*refs, n_views, tk, inv_hw):
    """refs = (x_0..x_{V-1}, o_0..o_{V-1}, acc_0..acc_{V-1}).

    x_i:   (TM, TK) tile of view i (rows = flattened N*C, cols = HW chunk)
    o_i:   (TM, 1) per-row mean, written on the last HW chunk
    acc_i: (TM, 1) f32 running sum, persistent across the HW-chunk grid axis
    """
    x_refs = refs[:n_views]
    o_refs = refs[n_views:2 * n_views]
    acc_refs = refs[2 * n_views:]

    k = pl.program_id(1)

    @pl.when(k == 0)
    def _init():
        for acc in acc_refs:
            acc[...] = jnp.zeros_like(acc)

    for x_ref, acc in zip(x_refs, acc_refs):
        x = x_ref[...].astype(jnp.float32)                      # (TM, TK)
        acc[...] += _row_sum(x, tk)

    @pl.when(k == pl.num_programs(1) - 1)
    def _finalize():
        for o_ref, acc in zip(o_refs, acc_refs):
            o_ref[...] = (acc[...] * inv_hw).astype(o_ref.dtype)


def _fused_avg_pool(tensors):
    """tensors: list of identically-shaped/dtyped (N, C, H, W) -> list of (N, C)."""
    n_views = len(tensors)
    n, c, h, w = tensors[0].shape
    hw = h * w
    rows = n * c
    dtype = tensors[0].dtype
    itemsize = jnp.dtype(dtype).itemsize

    tk = _choose_tk(hw)
    tm = _choose_tm(rows, tk, itemsize, n_views)
    n_k = hw // tk

    flat = [t.reshape(rows, hw) for t in tensors]
    out_shape = tuple(jax.ShapeDtypeStruct((rows, 1), dtype) for _ in range(n_views))
    inv_hw = 1.0 / float(hw)

    if n_k == 1:
        kernel = functools.partial(
            _avg_pool_kernel_single, n_views=n_views, tk=tk, inv_hw=inv_hw)
        grid = (pl.cdiv(rows, tm),)
        in_specs = [pl.BlockSpec((tm, tk), lambda i: (i, 0)) for _ in range(n_views)]
        out_specs = tuple(pl.BlockSpec((tm, 1), lambda i: (i, 0))
                          for _ in range(n_views))
        scratch = []
        dims = ("parallel",)
    else:
        kernel = functools.partial(
            _avg_pool_kernel_multi, n_views=n_views, tk=tk, inv_hw=inv_hw)
        grid = (pl.cdiv(rows, tm), n_k)      # rows parallel, HW reduction last
        in_specs = [pl.BlockSpec((tm, tk), lambda i, k: (i, k))
                    for _ in range(n_views)]
        out_specs = tuple(pl.BlockSpec((tm, 1), lambda i, k: (i, 0))
                          for _ in range(n_views))
        scratch = [pltpu.VMEM((tm, 1), jnp.float32) for _ in range(n_views)]
        dims = ("parallel", "arbitrary")

    outs = pl.pallas_call(
        kernel,
        out_shape=out_shape,
        grid_spec=pltpu.PrefetchScalarGridSpec(
            num_scalar_prefetch=0,
            grid=grid,
            in_specs=in_specs,
            out_specs=out_specs,
            scratch_shapes=scratch,
        ),
        compiler_params=pltpu.CompilerParams(
            dimension_semantics=dims,
            vmem_limit_bytes=32 * 1024 * 1024,
        ),
    )(*flat)

    if not isinstance(outs, (tuple, list)):
        outs = (outs,)
    return [o.reshape(n, c) for o in outs]


def single_avg_pool(x):
    """x: (N, C, H, W) -> (N, C), mean over H*W (matches view(n,c,-1).mean(-1))."""
    return _fused_avg_pool([x])[0]


def all_views_avg_pool(x_dict):
    """Forward pass of AllViewsAvgPool: dict of NCHW tensors -> dict of (N, C).

    Views sharing (shape, dtype) are fused into a single pallas_call.
    """
    groups = {}
    for name, t in x_dict.items():
        sig = (tuple(t.shape), jnp.dtype(t.dtype).name)
        groups.setdefault(sig, []).append(name)

    out = {}
    for g_names in groups.values():
        pooled = _fused_avg_pool([x_dict[nm] for nm in g_names])
        for nm, p in zip(g_names, pooled):
            out[nm] = p
    return out


if __name__ == "__main__":
    key = jax.random.PRNGKey(0)
    view_names = ["L-CC", "R-CC", "L-MLO", "R-MLO"]

    # --- main demo: small shapes, single-chunk path ---
    N, C, H, W = 2, 4, 16, 16
    x = {}
    for name in view_names:
        key, sub = jax.random.split(key)
        x[name] = jax.random.normal(sub, (N, C, H, W), dtype=jnp.float32)

    out = all_views_avg_pool(x)
    out = jax.tree_util.tree_map(jax.block_until_ready, out)

    for name in view_names:
        ref = x[name].reshape(N, C, -1).mean(-1)
        assert out[name].shape == (N, C), name
        assert jnp.allclose(out[name], ref, atol=1e-5, rtol=1e-5), name

    # --- secondary check: larger HW exercises the multi-chunk (accumulator) path ---
    key, sub = jax.random.split(key)
    x2 = {"L-CC": jax.random.normal(sub, (2, 4, 64, 64), dtype=jnp.float32)}
    out2 = all_views_avg_pool(x2)
    out2 = jax.tree_util.tree_map(jax.block_until_ready, out2)
    ref2 = x2["L-CC"].reshape(2, 4, -1).mean(-1)
    assert jnp.allclose(out2["L-CC"], ref2, atol=1e-5, rtol=1e-5)

    print("KERNEL_OK")
</pallas_src>

<mosaic_0001>
module attributes {stable_mosaic.version = 11 : i64} {
  func.func @_avg_pool_kernel_single(%arg0: i32, %arg1: memref<8x256xf32, #tpu.memory_space<vmem>>, %arg2: memref<8x256xf32, #tpu.memory_space<vmem>>, %arg3: memref<8x256xf32, #tpu.memory_space<vmem>>, %arg4: memref<8x256xf32, #tpu.memory_space<vmem>>, %arg5: memref<8x1xf32, #tpu.memory_space<vmem>>, %arg6: memref<8x1xf32, #tpu.memory_space<vmem>>, %arg7: memref<8x1xf32, #tpu.memory_space<vmem>>, %arg8: memref<8x1xf32, #tpu.memory_space<vmem>>) attributes {dimension_semantics = [#tpu.dimension_semantics<parallel>], iteration_bounds = array<i64: 1>, scalar_prefetch = 0 : i64, scratch_operands = 0 : i64, tpu.core_type = #tpu.core_type<tc>, window_params = [{transform_indices = @transform_0, window_bounds = array<i64: 8, 256>}, {transform_indices = @transform_1, window_bounds = array<i64: 8, 256>}, {transform_indices = @transform_2, window_bounds = array<i64: 8, 256>}, {transform_indices = @transform_3, window_bounds = array<i64: 8, 256>}, {transform_indices = @transform_4, window_bounds = array<i64: 8, 1>}, {transform_indices = @transform_5, window_bounds = array<i64: 8, 1>}, {transform_indices = @transform_6, window_bounds = array<i64: 8, 1>}, {transform_indices = @transform_7, window_bounds = array<i64: 8, 1>}]} {
    %c0 = arith.constant 0 : index
    %c0_0 = arith.constant 0 : index
    %0 = vector.load %arg1[%c0, %c0_0] : memref<8x256xf32, #tpu.memory_space<vmem>>, vector<8x256xf32>
    %1 = vector.extract_strided_slice %0 {offsets = [0, 0], sizes = [8, 128], strides = [1, 1]} : vector<8x256xf32> to vector<8x128xf32>
    %2 = vector.extract_strided_slice %0 {offsets = [0, 128], sizes = [8, 128], strides = [1, 1]} : vector<8x256xf32> to vector<8x128xf32>
    %3 = arith.addf %1, %2 : vector<8x128xf32>
    %cst = arith.constant dense<0.000000e+00> : vector<8xf32>
    %4 = vector.multi_reduction <add>, %3, %cst [1] : vector<8x128xf32> to vector<8xf32>
    %5 = vector.shape_cast %4 : vector<8xf32> to vector<8x1xf32>
    %cst_1 = arith.constant 3.906250e-03 : f32
    %6 = vector.broadcast %cst_1 : f32 to vector<8x1xf32>
    %7 = arith.mulf %5, %6 : vector<8x1xf32>
    %c0_2 = arith.constant 0 : index
    %c0_3 = arith.constant 0 : index
    %8 = vector.load %arg5[%c0_2, %c0_3] : memref<8x1xf32, #tpu.memory_space<vmem>>, vector<8x1xf32>
    tpu.vector_store %arg5[%c0_2, %c0_3], %7 {strides = array<i32>} : memref<8x1xf32, #tpu.memory_space<vmem>>, vector<8x1xf32>,
    %c0_4 = arith.constant 0 : index
    %c0_5 = arith.constant 0 : index
    %9 = vector.load %arg2[%c0_4, %c0_5] : memref<8x256xf32, #tpu.memory_space<vmem>>, vector<8x256xf32>
    %10 = vector.extract_strided_slice %9 {offsets = [0, 0], sizes = [8, 128], strides = [1, 1]} : vector<8x256xf32> to vector<8x128xf32>
    %11 = vector.extract_strided_slice %9 {offsets = [0, 128], sizes = [8, 128], strides = [1, 1]} : vector<8x256xf32> to vector<8x128xf32>
    %12 = arith.addf %10, %11 : vector<8x128xf32>
    %cst_6 = arith.constant dense<0.000000e+00> : vector<8xf32>
    %13 = vector.multi_reduction <add>, %12, %cst_6 [1] : vector<8x128xf32> to vector<8xf32>
    %14 = vector.shape_cast %13 : vector<8xf32> to vector<8x1xf32>
    %cst_7 = arith.constant 3.906250e-03 : f32
    %15 = vector.broadcast %cst_7 : f32 to vector<8x1xf32>
    %16 = arith.mulf %14, %15 : vector<8x1xf32>
    %c0_8 = arith.constant 0 : index
    %c0_9 = arith.constant 0 : index
    %17 = vector.load %arg6[%c0_8, %c0_9] : memref<8x1xf32, #tpu.memory_space<vmem>>, vector<8x1xf32>
    tpu.vector_store %arg6[%c0_8, %c0_9], %16 {strides = array<i32>} : memref<8x1xf32, #tpu.memory_space<vmem>>, vector<8x1xf32>,
    %c0_10 = arith.constant 0 : index
    %c0_11 = arith.constant 0 : index
    %18 = vector.load %arg3[%c0_10, %c0_11] : memref<8x256xf32, #tpu.memory_space<vmem>>, vector<8x256xf32>
    %19 = vector.extract_strided_slice %18 {offsets = [0, 0], sizes = [8, 128], strides = [1, 1]} : vector<8x256xf32> to vector<8x128xf32>
    %20 = vector.extract_strided_slice %18 {offsets = [0, 128], sizes = [8, 128], strides = [1, 1]} : vector<8x256xf32> to vector<8x128xf32>
    %21 = arith.addf %19, %20 : vector<8x128xf32>
    %cst_12 = arith.constant dense<0.000000e+00> : vector<8xf32>
    %22 = vector.multi_reduction <add>, %21, %cst_12 [1] : vector<8x128xf32> to vector<8xf32>
    %23 = vector.shape_cast %22 : vector<8xf32> to vector<8x1xf32>
    %cst_13 = arith.constant 3.906250e-03 : f32
    %24 = vector.broadcast %cst_13 : f32 to vector<8x1xf32>
    %25 = arith.mulf %23, %24 : vector<8x1xf32>
    %c0_14 = arith.constant 0 : index
    %c0_15 = arith.constant 0 : index
    %26 = vector.load %arg7[%c0_14, %c0_15] : memref<8x1xf32, #tpu.memory_space<vmem>>, vector<8x1xf32>
    tpu.vector_store %arg7[%c0_14, %c0_15], %25 {strides = array<i32>} : memref<8x1xf32, #tpu.memory_space<vmem>>, vector<8x1xf32>,
    %c0_16 = arith.constant 0 : index
    %c0_17 = arith.constant 0 : index
    %27 = vector.load %arg4[%c0_16, %c0_17] : memref<8x256xf32, #tpu.memory_space<vmem>>, vector<8x256xf32>
    %28 = vector.extract_strided_slice %27 {offsets = [0, 0], sizes = [8, 128], strides = [1, 1]} : vector<8x256xf32> to vector<8x128xf32>
    %29 = vector.extract_strided_slice %27 {offsets = [0, 128], sizes = [8, 128], strides = [1, 1]} : vector<8x256xf32> to vector<8x128xf32>
    %30 = arith.addf %28, %29 : vector<8x128xf32>
    %cst_18 = arith.constant dense<0.000000e+00> : vector<8xf32>
    %31 = vector.multi_reduction <add>, %30, %cst_18 [1] : vector<8x128xf32> to vector<8xf32>
    %32 = vector.shape_cast %31 : vector<8xf32> to vector<8x1xf32>
    %cst_19 = arith.constant 3.906250e-03 : f32
    %33 = vector.broadcast %cst_19 : f32 to vector<8x1xf32>
    %34 = arith.mulf %32, %33 : vector<8x1xf32>
    %c0_20 = arith.constant 0 : index
    %c0_21 = arith.constant 0 : index
    %35 = vector.load %arg8[%c0_20, %c0_21] : memref<8x1xf32, #tpu.memory_space<vmem>>, vector<8x1xf32>
    tpu.vector_store %arg8[%c0_20, %c0_21], %34 {strides = array<i32>} : memref<8x1xf32, #tpu.memory_space<vmem>>, vector<8x1xf32>,
    return
  }
  func.func @transform_0(%arg0: i32) -> (i32, i32) {
    %c0_i32 = arith.constant 0 : i32
    %c0_i32_0 = arith.constant 0 : i32
    return %arg0, %c0_i32 : i32, i32
  }
  func.func @transform_1(%arg0: i32) -> (i32, i32) {
    %c0_i32 = arith.constant 0 : i32
    %c0_i32_0 = arith.constant 0 : i32
    return %arg0, %c0_i32 : i32, i32
  }
  func.func @transform_2(%arg0: i32) -> (i32, i32) {
    %c0_i32 = arith.constant 0 : i32
    %c0_i32_0 = arith.constant 0 : i32
    return %arg0, %c0_i32 : i32, i32
  }
  func.func @transform_3(%arg0: i32) -> (i32, i32) {
    %c0_i32 = arith.constant 0 : i32
    %c0_i32_0 = arith.constant 0 : i32
    return %arg0, %c0_i32 : i32, i32
  }
  func.func @transform_4(%arg0: i32) -> (i32, i32) {
    %c0_i32 = arith.constant 0 : i32
    %c0_i32_0 = arith.constant 0 : i32
    return %arg0, %c0_i32 : i32, i32
  }
  func.func @transform_5(%arg0: i32) -> (i32, i32) {
    %c0_i32 = arith.constant 0 : i32
    %c0_i32_0 = arith.constant 0 : i32
    return %arg0, %c0_i32 : i32, i32
  }
  func.func @transform_6(%arg0: i32) -> (i32, i32) {
    %c0_i32 = arith.constant 0 : i32
    %c0_i32_0 = arith.constant 0 : i32
    return %arg0, %c0_i32 : i32, i32
  }
  func.func @transform_7(%arg0: i32) -> (i32, i32) {
    %c0_i32 = arith.constant 0 : i32
    %c0_i32_0 = arith.constant 0 : i32
    return %arg0, %c0_i32 : i32, i32
  }
}

</mosaic_0001>

<llo_original>
// kernel: tpu_custom_call.1
$region0: #{tpu_custom_call.1}
  #allocation0 [shape = 'u32[]', space=smem, size = 0x4, offset = 0x4, fixed_abs, tag = 'smem constant byte address 0x4 - core index']
  #allocation1 [shape = 'u32[72,128]{1,0:T(1,128)}', space=vmem, size = 0x9000, scoped, tag = 'internal scratch']
  %s0 = inlined_call_operand.hbm [shape: f32[8,256], index: 0, kind: input, shape index: {}]
  %s1 = inlined_call_operand.hbm [shape: f32[8,256], index: 1, kind: input, shape index: {}]
  %s2 = inlined_call_operand.hbm [shape: f32[8,256], index: 2, kind: input, shape index: {}]
  %s3 = inlined_call_operand.hbm [shape: f32[8,256], index: 3, kind: input, shape index: {}]
  %s4 = inlined_call_operand.vmem [shape: f32[8,1], index: 4, kind: output, shape index: {0}]
  %s5 = inlined_call_operand.vmem [shape: f32[8,1], index: 5, kind: output, shape index: {1}]
  %s6 = inlined_call_operand.vmem [shape: f32[8,1], index: 6, kind: output, shape index: {2}]
  %s7 = inlined_call_operand.vmem [shape: f32[8,1], index: 7, kind: output, shape index: {3}]
  %8 = xla_tuple %s4, %s5, %s6, %s7
  %s9 = sld [smem:[#allocation0]]
  $region66: #{tpu_custom_call.1} parent=0
    _
  %s11 = ssub.s32 1, %s9
  %s12 = scalar_select 0, %s11, %s9
  $region1: #{tpu_custom_call.1} parent=0
    #allocation2 [shape = 'u8[8192]{0}', space=vmem, size = 0x2000, scoped, tag = 'input window, operand 0, single buffered']
    #allocation3 [shape = 's32[1]{0}', space=sflag, size = 0x4, scoped, tag = 'scoped memory for tpu_custom_call.1']
    #allocation4 [shape = 'u8[8192]{0}', space=vmem, size = 0x2000, scoped, tag = 'input window, operand 1, single buffered']
    #allocation5 [shape = 's32[1]{0}', space=sflag, size = 0x4, scoped, tag = 'scoped memory for tpu_custom_call.1']
    #allocation6 [shape = 'u8[8192]{0}', space=vmem, size = 0x2000, scoped, tag = 'input window, operand 2, single buffered']
    #allocation7 [shape = 'u8[8192]{0}', space=vmem, size = 0x2000, scoped, tag = 'input window, operand 3, single buffered']
    #allocation8 [shape = 's32[1]{0}', space=sflag, size = 0x4, scoped, tag = 'scoped memory for tpu_custom_call.1']
    %13 = vsyncpa [#allocation3], 0
    %14 = vsyncpa [#allocation5], 0
    %15 = vsyncpa [#allocation8], 0
    // Predicated region
    $region2: #{tpu_custom_call.1} parent=1 // pred_check
      _
    $region3: #{tpu_custom_call.1} parent=1 // pred_check_branch
      %17 = sbr.rel (0) target = $region5
    $region4: #{tpu_custom_call.1} parent=1 // pred_region
      %19 = vsyncadd [#allocation3], 0
      %s21 = sshll.u32 %s0, 4
      %s22 = int_to_ptr.hbm [resolvable:$true] %s21
      %s23 = sshll.u32 [#allocation2], 4
      %s24 = int_to_ptr.vmem [resolvable:$true] %s23
      %26 = dma.hbm_to_vmem [thread:$0]  %s22, 256, %s24, [#allocation3]
    $region5: #{tpu_custom_call.1} parent=1 // pred_fallthru
      _
    // Predicated region
    $region6: #{tpu_custom_call.1} parent=1 // pred_check
      _
    $region7: #{tpu_custom_call.1} parent=1 // pred_check_branch
      %28 = sbr.rel (0) target = $region9
    $region8: #{tpu_custom_call.1} parent=1 // pred_region
      %30 = vsyncadd [#allocation5], 0
      %s32 = sshll.u32 %s1, 4
      %s33 = int_to_ptr.hbm [resolvable:$true] %s32
      %s34 = sshll.u32 [#allocation4], 4
      %s35 = int_to_ptr.vmem [resolvable:$true] %s34
      %37 = dma.hbm_to_vmem [thread:$0]  %s33, 256, %s35, [#allocation5]
    $region9: #{tpu_custom_call.1} parent=1 // pred_fallthru
      _
    // Predicated region
    $region10: #{tpu_custom_call.1} parent=1 // pred_check
      _
    $region11: #{tpu_custom_call.1} parent=1 // pred_check_branch
      %39 = sbr.rel (0) target = $region13
    $region12: #{tpu_custom_call.1} parent=1 // pred_region
      %41 = vsyncadd [#allocation5], 0
      %s43 = sshll.u32 %s2, 4
      %s44 = int_to_ptr.hbm [resolvable:$true] %s43
      %s45 = sshll.u32 [#allocation6], 4
      %s46 = int_to_ptr.vmem [resolvable:$true] %s45
      %48 = dma.hbm_to_vmem [thread:$0]  %s44, 256, %s46, [#allocation5]
    $region13: #{tpu_custom_call.1} parent=1 // pred_fallthru
      _
    // Predicated region
    $region14: #{tpu_custom_call.1} parent=1 // pred_check
      _
    $region15: #{tpu_custom_call.1} parent=1 // pred_check_branch
      %50 = sbr.rel (0) target = $region17
    $region16: #{tpu_custom_call.1} parent=1 // pred_region
      %52 = vsyncadd [#allocation8], 0
      %s54 = sshll.u32 %s3, 4
      %s55 = int_to_ptr.hbm [resolvable:$true] %s54
      %s56 = sshll.u32 [#allocation7], 4
      %s57 = int_to_ptr.vmem [resolvable:$true] %s56
      %59 = dma.hbm_to_vmem [thread:$0]  %s55, 256, %s57, [#allocation8]
    $region17: #{tpu_custom_call.1} parent=1 // pred_fallthru
      _
    // Predicated region
    $region18: #{tpu_custom_call.1} parent=1 // pred_check
      _
    $region19: #{tpu_custom_call.1} parent=1 // pred_check_branch
      %61 = sbr.rel (0) target = $region21
    $region20: #{tpu_custom_call.1} parent=1 // pred_region
      %63 = dma.done [#allocation3], 256
    $region21: #{tpu_custom_call.1} parent=1 // pred_fallthru
      _
    // Predicated region
    $region22: #{tpu_custom_call.1} parent=1 // pred_check
      _
    $region23: #{tpu_custom_call.1} parent=1 // pred_check_branch
      %65 = sbr.rel (0) target = $region25
    $region24: #{tpu_custom_call.1} parent=1 // pred_region
      %67 = dma.done [#allocation5], 256
    $region25: #{tpu_custom_call.1} parent=1 // pred_fallthru
      _
    // Predicated region
    $region26: #{tpu_custom_call.1} parent=1 // pred_check
      _
    $region27: #{tpu_custom_call.1} parent=1 // pred_check_branch
      %69 = sbr.rel (0) target = $region29
    $region28: #{tpu_custom_call.1} parent=1 // pred_region
      %71 = dma.done [#allocation5], 256
    $region29: #{tpu_custom_call.1} parent=1 // pred_fallthru
      _
    // Predicated region
    $region30: #{tpu_custom_call.1} parent=1 // pred_check
      _
    $region31: #{tpu_custom_call.1} parent=1 // pred_check_branch
      %73 = sbr.rel (0) target = $region33
    $region32: #{tpu_custom_call.1} parent=1 // pred_region
      %75 = dma.done [#allocation8], 256
    $region33: #{tpu_custom_call.1} parent=1 // pred_fallthru
      _
    %v76 = vld [vmem:[#allocation2] sm:$0xff]
    %v77 = vld [vmem:[#allocation2 + $0x8] sm:$0xff]
    %v78 = vadd.f32 %v76, %v77
    %79 = vadd.xlane.f32.xlu0 %v78
    %v80 = vpop.xlane.xlu0 %79
    %v81 = vmul.f32 %v80, 0.00390625
    %vm82 = vcmask 7168
    %83 = vst.msk [vmem:[%s4] sm:$0xff] %vm82, %v81
    %v84 = vld [vmem:[#allocation4] sm:$0xff]
    %v85 = vld [vmem:[#allocation4 + $0x8] sm:$0xff]
    %v86 = vadd.f32 %v84, %v85
    %87 = vadd.xlane.f32.xlu0 %v86
    %v88 = vpop.xlane.xlu0 %87
    %v89 = vmul.f32 %v88, 0.00390625
    %90 = vst.msk [vmem:[%s5] sm:$0xff] %vm82, %v89
    %v91 = vld [vmem:[#allocation6] sm:$0xff]
    %v92 = vld [vmem:[#allocation6 + $0x8] sm:$0xff]
    %v93 = vadd.f32 %v91, %v92
    %94 = vadd.xlane.f32.xlu0 %v93
    %v95 = vpop.xlane.xlu0 %94
    %v96 = vmul.f32 %v95, 0.00390625
    %97 = vst.msk [vmem:[%s6] sm:$0xff] %vm82, %v96
    %v98 = vld [vmem:[#allocation7] sm:$0xff]
    %v99 = vld [vmem:[#allocation7 + $0x8] sm:$0xff]
    %v100 = vadd.f32 %v98, %v99
    %101 = vadd.xlane.f32.xlu0 %v100
    %v102 = vpop.xlane.xlu0 %101
    %v103 = vmul.f32 %v102, 0.00390625
    %104 = vst.msk [vmem:[%s7] sm:$0xff] %vm82, %v103
    // Predicated region
    $region34: #{tpu_custom_call.1} parent=1 // pred_check
      _
    $region35: #{tpu_custom_call.1} parent=1 // pred_check_branch
      %106 = sbr.rel (0) target = $region37
    $region36: #{tpu_custom_call.1} parent=1 // pred_region
      _
    $region37: #{tpu_custom_call.1} parent=1 // pred_fallthru
      _
    // Predicated region
    $region38: #{tpu_custom_call.1} parent=1 // pred_check
      _
    $region39: #{tpu_custom_call.1} parent=1 // pred_check_branch
      %108 = sbr.rel (0) target = $region41
    $region40: #{tpu_custom_call.1} parent=1 // pred_region
      _
    $region41: #{tpu_custom_call.1} parent=1 // pred_fallthru
      _
    // Predicated region
    $region42: #{tpu_custom_call.1} parent=1 // pred_check
      _
    $region43: #{tpu_custom_call.1} parent=1 // pred_check_branch
      %110 = sbr.rel (0) target = $region45
    $region44: #{tpu_custom_call.1} parent=1 // pred_region
      _
    $region45: #{tpu_custom_call.1} parent=1 // pred_fallthru
      _
    // Predicated region
    $region46: #{tpu_custom_call.1} parent=1 // pred_check
      _
    $region47: #{tpu_custom_call.1} parent=1 // pred_check_branch
      %112 = sbr.rel (0) target = $region49
    $region48: #{tpu_custom_call.1} parent=1 // pred_region
      _
    $region49: #{tpu_custom_call.1} parent=1 // pred_fallthru
      _
    // Predicated region
    $region50: #{tpu_custom_call.1} parent=1 // pred_check
      _
    $region51: #{tpu_custom_call.1} parent=1 // pred_check_branch
      %114 = sbr.rel (0) target = $region53
    $region52: #{tpu_custom_call.1} parent=1 // pred_region
      _
    $region53: #{tpu_custom_call.1} parent=1 // pred_fallthru
      _
    // Predicated region
    $region54: #{tpu_custom_call.1} parent=1 // pred_check
      _
    $region55: #{tpu_custom_call.1} parent=1 // pred_check_branch
      %116 = sbr.rel (0) target = $region57
    $region56: #{tpu_custom_call.1} parent=1 // pred_region
      _
    $region57: #{tpu_custom_call.1} parent=1 // pred_fallthru
      _
    // Predicated region
    $region58: #{tpu_custom_call.1} parent=1 // pred_check
      _
    $region59: #{tpu_custom_call.1} parent=1 // pred_check_branch
      %118 = sbr.rel (0) target = $region61
    $region60: #{tpu_custom_call.1} parent=1 // pred_region
      _
    $region61: #{tpu_custom_call.1} parent=1 // pred_fallthru
      _
    // Predicated region
    $region62: #{tpu_custom_call.1} parent=1 // pred_check
      _
    $region63: #{tpu_custom_call.1} parent=1 // pred_check_branch
      %120 = sbr.rel (0) target = $region65
    $region64: #{tpu_custom_call.1} parent=1 // pred_region
      _
    $region65: #{tpu_custom_call.1} parent=1 // pred_fallthru
      _
    %121 = vsyncpa [#allocation3], 1
    %122 = vsyncpa [#allocation5], 1
    %123 = vsyncpa [#allocation8], 1

</llo_original>
